<compile_context>
chip_gen: v6e
topology: v6e:2x2x1
jax: 0.10.0
libtpu: 0.0.40
codegen_flags: <defaults>
</compile_context>

<pallas_src>
import numpy as np
import jax
import jax.numpy as jnp
from jax import lax
from jax.experimental import pallas as pl
from jax.experimental.pallas import tpu as pltpu


def _underline_kernel(img_ref, out_ref):
    # img_ref / out_ref: (3, H, W) uint8 block for one image of the batch.
    img_u8 = img_ref[...]                       # read once (uint8 in VMEM)
    img = img_u8.astype(jnp.int32)              # widen on-chip; HBM stays uint8

    r, g, b = img[0], img[1], img[2]

    # PIL 'L' conversion: L = (R*19595 + G*38470 + B*7471 + 0x8000) >> 16.
    # The numerator is provably nonnegative, so a logical right shift is exact
    # (and avoids the sign-correction ops of a signed floor-div).
    num = r * 19595 + g * 38470 + b * 7471 + 32768
    gray = lax.shift_right_logical(num, 16)     # (H, W) int32
    black = gray < 50                           # (H, W) bool

    H, W = gray.shape
    # Collapse to 1-D occupancy vectors first, then reduce small iotas:
    # two axis reductions instead of four full (H, W) where+global reductions,
    # and no (H, W) int32 iota temporaries.
    black_row = jnp.any(black, axis=1, keepdims=True)   # (H, 1)
    black_col = jnp.any(black, axis=0, keepdims=True)   # (1, W)
    row_iota = lax.broadcasted_iota(jnp.int32, (H, 1), 0)
    col_iota = lax.broadcasted_iota(jnp.int32, (1, W), 1)

    big = jnp.int32(1 << 30)
    y1 = jnp.max(jnp.where(black_row, row_iota, -1))    # max black row (-1 if none)
    x0 = jnp.min(jnp.where(black_col, col_iota, big))   # min black col
    x1 = jnp.max(jnp.where(black_col, col_iota, -1))    # max black col
    any_black = y1 >= 0                                  # y1 == -1 iff no black pixel

    # Underline region: x in [x0, x1), y in {y1, y1-1, y1-2}. Negative y rows fall
    # outside the iota range (same effect as putpixel's try/except skipping them).
    # No black pixels -> any_black False -> identity (the "except: return img" path).
    row_ok = (row_iota <= y1) & (row_iota >= y1 - 2)     # (H, 1)
    col_ok = (col_iota >= x0) & (col_iota < x1)          # (1, W)
    under = row_ok & col_ok & any_black                  # (H, W) via broadcast

    # Single lane-dense store of the full block, packed back to uint8.
    out_ref[...] = jnp.where(under[None, :, :], 0, img).astype(jnp.uint8)


def underline_batch(imgs_u8):
    """imgs_u8: uint8 array of shape (N, 3, H, W). Returns uint8 (N, 3, H, W)."""
    N, C, H, W = imgs_u8.shape
    assert C == 3 and imgs_u8.dtype == jnp.uint8

    # in + out blocks, double-buffered, plus slack; only raise the scoped VMEM
    # limit beyond the default if the image actually needs it.
    needed_vmem = 8 * C * H * W + (4 << 20)
    vmem_limit = None if needed_vmem <= (32 << 20) else int(min(needed_vmem, 100 << 20))
    # NOTE: for very large images (beyond v7x's 64 MiB VMEM) this single-block design
    # should be replaced by a two-pass tiled reduce + scalar-prefetch paint structure.

    return pl.pallas_call(
        _underline_kernel,
        out_shape=jax.ShapeDtypeStruct((N, C, H, W), jnp.uint8),
        grid=(N,),
        in_specs=[pl.BlockSpec((None, C, H, W), lambda n: (n, 0, 0, 0))],
        out_specs=pl.BlockSpec((None, C, H, W), lambda n: (n, 0, 0, 0)),
        input_output_aliases={0: 0},
        compiler_params=pltpu.CompilerParams(
            dimension_semantics=("parallel",),
            vmem_limit_bytes=vmem_limit,
        ),
    )(imgs_u8)


def underline(img_u8):
    """Single image: uint8 (3, H, W) -> uint8 (3, H, W)."""
    return underline_batch(img_u8[None])[0]


def _ref_underline(img_np):
    """NumPy reference mirroring the PyTorch/PIL module exactly (one image, CHW)."""
    out = img_np.copy()
    r = img_np[0].astype(np.int64)
    g = img_np[1].astype(np.int64)
    b = img_np[2].astype(np.int64)
    gray = (r * 19595 + g * 38470 + b * 7471 + 32768) >> 16
    black = np.where(gray < 50)
    if black[0].size == 0:
        return out
    y1 = int(black[0].max())
    x0 = int(black[1].min())
    x1 = int(black[1].max())
    H, W = gray.shape
    for x in range(x0, x1):
        for y in (y1, y1 - 1, y1 - 2):
            if 0 <= y < H and 0 <= x < W:
                out[:, y, x] = 0
    return out


if __name__ == "__main__":
    key = jax.random.PRNGKey(0)
    H, W = 16, 16
    k_bg0, k_txt, k_bg1 = jax.random.split(key, 3)

    # Image 0: bright background with a dark "text" patch -> black pixels exist.
    bg0 = jax.random.randint(k_bg0, (3, H, W), 100, 256, dtype=jnp.int32)
    txt = jax.random.randint(k_txt, (3, 6, 10), 0, 40, dtype=jnp.int32)
    img0 = bg0.at[:, 4:10, 3:13].set(txt).astype(jnp.uint8)

    # Image 1: all bright -> no black pixels -> identity path.
    img1 = jax.random.randint(k_bg1, (3, H, W), 100, 256, dtype=jnp.int32).astype(jnp.uint8)

    batch = jnp.stack([img0, img1], axis=0)   # (2, 3, 16, 16) uint8
    batch_np = np.asarray(batch)              # snapshot before the aliased (donating) call

    out = jax.block_until_ready(underline_batch(batch))

    ref = np.stack([_ref_underline(batch_np[i]) for i in range(batch_np.shape[0])])
    assert out.shape == batch_np.shape and out.dtype == jnp.uint8
    np.testing.assert_array_equal(np.asarray(out), ref)

    print("KERNEL_OK")
</pallas_src>

<mosaic_0001>
module attributes {stable_mosaic.version = 11 : i64} {
  func.func @_underline_kernel(%arg0: i32, %arg1: memref<1x3x16x16xi8, #tpu.memory_space<vmem>>, %arg2: memref<1x3x16x16xi8, #tpu.memory_space<vmem>>) attributes {dimension_semantics = [#tpu.dimension_semantics<parallel>], iteration_bounds = array<i64: 2>, scalar_prefetch = 0 : i64, scratch_operands = 0 : i64, tpu.core_type = #tpu.core_type<tc>, window_params = [{transform_indices = @transform_0, window_bounds = array<i64: 1, 3, 16, 16>}, {transform_indices = @transform_1, window_bounds = array<i64: 1, 3, 16, 16>}]} {
    %c0 = arith.constant 0 : index
    %c0_0 = arith.constant 0 : index
    %c0_1 = arith.constant 0 : index
    %c0_2 = arith.constant 0 : index
    %0 = vector.load %arg1[%c0, %c0_0, %c0_1, %c0_2] : memref<1x3x16x16xi8, #tpu.memory_space<vmem>>, vector<1x3x16x16xi8>
    %1 = vector.shape_cast %0 : vector<1x3x16x16xi8> to vector<3x16x16xi8>
    %2 = arith.extui %1 : vector<3x16x16xi8> to vector<3x16x16xi32>
    %3 = vector.extract_strided_slice %2 {offsets = [0, 0, 0], sizes = [1, 16, 16], strides = [1, 1, 1]} : vector<3x16x16xi32> to vector<1x16x16xi32>
    %4 = vector.shape_cast %3 : vector<1x16x16xi32> to vector<16x16xi32>
    %5 = vector.extract_strided_slice %2 {offsets = [1, 0, 0], sizes = [1, 16, 16], strides = [1, 1, 1]} : vector<3x16x16xi32> to vector<1x16x16xi32>
    %6 = vector.shape_cast %5 : vector<1x16x16xi32> to vector<16x16xi32>
    %7 = vector.extract_strided_slice %2 {offsets = [2, 0, 0], sizes = [1, 16, 16], strides = [1, 1, 1]} : vector<3x16x16xi32> to vector<1x16x16xi32>
    %8 = vector.shape_cast %7 : vector<1x16x16xi32> to vector<16x16xi32>
    %c19595_i32 = arith.constant 19595 : i32
    %9 = vector.broadcast %c19595_i32 : i32 to vector<16x16xi32>
    %10 = arith.muli %4, %9 : vector<16x16xi32>
    %c38470_i32 = arith.constant 38470 : i32
    %11 = vector.broadcast %c38470_i32 : i32 to vector<16x16xi32>
    %12 = arith.muli %6, %11 : vector<16x16xi32>
    %13 = arith.addi %10, %12 : vector<16x16xi32>
    %c7471_i32 = arith.constant 7471 : i32
    %14 = vector.broadcast %c7471_i32 : i32 to vector<16x16xi32>
    %15 = arith.muli %8, %14 : vector<16x16xi32>
    %16 = arith.addi %13, %15 : vector<16x16xi32>
    %c32768_i32 = arith.constant 32768 : i32
    %17 = vector.broadcast %c32768_i32 : i32 to vector<16x16xi32>
    %18 = arith.addi %16, %17 : vector<16x16xi32>
    %c16_i32 = arith.constant 16 : i32
    %19 = vector.broadcast %c16_i32 : i32 to vector<16x16xi32>
    %20 = arith.shrui %18, %19 : vector<16x16xi32>
    %c50_i32 = arith.constant 50 : i32
    %21 = vector.broadcast %c50_i32 : i32 to vector<16x16xi32>
    %22 = arith.cmpi slt, %20, %21 : vector<16x16xi32>
    %cst = arith.constant 1.000000e+00 : f32
    %cst_3 = arith.constant 0.000000e+00 : f32
    %23 = vector.broadcast %cst : f32 to vector<16x16xf32>
    %24 = vector.broadcast %cst_3 : f32 to vector<16x16xf32>
    %25 = arith.select %22, %23, %24 : vector<16x16xi1>, vector<16x16xf32>
    %cst_4 = arith.constant dense<0xFF800000> : vector<16xf32>
    %26 = vector.multi_reduction <maximumf>, %25, %cst_4 [1] : vector<16x16xf32> to vector<16xf32>
    %cst_5 = arith.constant 0.000000e+00 : f32
    %27 = vector.broadcast %cst_5 : f32 to vector<16xf32>
    %28 = arith.cmpf ogt, %26, %27 : vector<16xf32>
    %29 = vector.shape_cast %28 : vector<16xi1> to vector<16x1xi1>
    %cst_6 = arith.constant 1.000000e+00 : f32
    %cst_7 = arith.constant 0.000000e+00 : f32
    %30 = vector.broadcast %cst_6 : f32 to vector<16x16xf32>
    %31 = vector.broadcast %cst_7 : f32 to vector<16x16xf32>
    %32 = arith.select %22, %30, %31 : vector<16x16xi1>, vector<16x16xf32>
    %cst_8 = arith.constant dense<0xFF800000> : vector<16xf32>
    %33 = vector.multi_reduction <maximumf>, %32, %cst_8 [0] : vector<16x16xf32> to vector<16xf32>
    %cst_9 = arith.constant 0.000000e+00 : f32
    %34 = vector.broadcast %cst_9 : f32 to vector<16xf32>
    %35 = arith.cmpf ogt, %33, %34 : vector<16xf32>
    %36 = vector.shape_cast %35 : vector<16xi1> to vector<1x16xi1>
    %37 = tpu.iota {dimensions = array<i32: 0>} : vector<16x1xi32>
    %38 = tpu.iota {dimensions = array<i32: 1>} : vector<1x16xi32>
    %c-1_i32 = arith.constant -1 : i32
    %39 = vector.broadcast %c-1_i32 : i32 to vector<16x1xi32>
    %40 = arith.select %29, %37, %39 : vector<16x1xi1>, vector<16x1xi32>
    %41 = vector.shape_cast %40 : vector<16x1xi32> to vector<1x16x1xi32>
    %cst_10 = arith.constant dense<-2147483648> : vector<1xi32>
    %42 = vector.multi_reduction <maxsi>, %41, %cst_10 [1, 2] : vector<1x16x1xi32> to vector<1xi32>
    %43 = vector.shape_cast %42 : vector<1xi32> to vector<1x1x1xi32>
    %44 = vector.extract %43[0, 0, 0] : i32 from vector<1x1x1xi32>
    %c1073741824_i32 = arith.constant 1073741824 : i32
    %45 = vector.broadcast %c1073741824_i32 : i32 to vector<1x16xi32>
    %46 = arith.select %36, %38, %45 : vector<1x16xi1>, vector<1x16xi32>
    %47 = vector.shape_cast %46 : vector<1x16xi32> to vector<1x1x16xi32>
    %cst_11 = arith.constant dense<2147483647> : vector<1xi32>
    %48 = vector.multi_reduction <minsi>, %47, %cst_11 [1, 2] : vector<1x1x16xi32> to vector<1xi32>
    %49 = vector.shape_cast %48 : vector<1xi32> to vector<1x1x1xi32>
    %50 = vector.extract %49[0, 0, 0] : i32 from vector<1x1x1xi32>
    %c-1_i32_12 = arith.constant -1 : i32
    %51 = vector.broadcast %c-1_i32_12 : i32 to vector<1x16xi32>
    %52 = arith.select %36, %38, %51 : vector<1x16xi1>, vector<1x16xi32>
    %53 = vector.shape_cast %52 : vector<1x16xi32> to vector<1x1x16xi32>
    %cst_13 = arith.constant dense<-2147483648> : vector<1xi32>
    %54 = vector.multi_reduction <maxsi>, %53, %cst_13 [1, 2] : vector<1x1x16xi32> to vector<1xi32>
    %55 = vector.shape_cast %54 : vector<1xi32> to vector<1x1x1xi32>
    %56 = vector.extract %55[0, 0, 0] : i32 from vector<1x1x1xi32>
    %c0_i32 = arith.constant 0 : i32
    %57 = arith.cmpi sge, %44, %c0_i32 : i32
    %58 = vector.broadcast %44 : i32 to vector<16x1xi32>
    %59 = arith.cmpi sle, %37, %58 : vector<16x1xi32>
    %c2_i32 = arith.constant 2 : i32
    %60 = arith.subi %44, %c2_i32 : i32
    %61 = vector.broadcast %60 : i32 to vector<16x1xi32>
    %62 = arith.cmpi sge, %37, %61 : vector<16x1xi32>
    %63 = arith.andi %59, %62 : vector<16x1xi1>
    %64 = vector.broadcast %50 : i32 to vector<1x16xi32>
    %65 = arith.cmpi sge, %38, %64 : vector<1x16xi32>
    %66 = vector.broadcast %56 : i32 to vector<1x16xi32>
    %67 = arith.cmpi slt, %38, %66 : vector<1x16xi32>
    %68 = arith.andi %65, %67 : vector<1x16xi1>
    %69 = vector.broadcast %63 : vector<16x1xi1> to vector<16x16xi1>
    %70 = vector.broadcast %68 : vector<1x16xi1> to vector<16x16xi1>
    %71 = arith.andi %69, %70 : vector<16x16xi1>
    %72 = vector.broadcast %57 : i1 to vector<16x16xi1>
    %73 = arith.andi %71, %72 : vector<16x16xi1>
    %74 = vector.shape_cast %73 : vector<16x16xi1> to vector<1x16x16xi1>
    %c0_i32_14 = arith.constant 0 : i32
    %75 = vector.shape_cast %74 : vector<1x16x16xi1> to vector<1x16x16xi1>
    %76 = vector.broadcast %75 : vector<1x16x16xi1> to vector<3x16x16xi1>
    %77 = vector.broadcast %c0_i32_14 : i32 to vector<3x16x16xi32>
    %78 = arith.select %76, %77, %2 : vector<3x16x16xi1>, vector<3x16x16xi32>
    %79 = arith.trunci %78 : vector<3x16x16xi32> to vector<3x16x16xi8>
    %c0_15 = arith.constant 0 : index
    %c0_16 = arith.constant 0 : index
    %c0_17 = arith.constant 0 : index
    %c0_18 = arith.constant 0 : index
    %80 = vector.load %arg2[%c0_15, %c0_16, %c0_17, %c0_18] : memref<1x3x16x16xi8, #tpu.memory_space<vmem>>, vector<1x3x16x16xi8>
    %81 = vector.shape_cast %80 : vector<1x3x16x16xi8> to vector<3x16x16xi8>
    %82 = vector.shape_cast %79 : vector<3x16x16xi8> to vector<1x3x16x16xi8>
    tpu.vector_store %arg2[%c0_15, %c0_16, %c0_17, %c0_18], %82 {strides = array<i32>} : memref<1x3x16x16xi8, #tpu.memory_space<vmem>>, vector<1x3x16x16xi8>,
    return
  }
  func.func @transform_0(%arg0: i32) -> (i32, i32, i32, i32) {
    %c0_i32 = arith.constant 0 : i32
    %c0_i32_0 = arith.constant 0 : i32
    %c0_i32_1 = arith.constant 0 : i32
    %c0_i32_2 = arith.constant 0 : i32
    return %arg0, %c0_i32, %c0_i32_0, %c0_i32_1 : i32, i32, i32, i32
  }
  func.func @transform_1(%arg0: i32) -> (i32, i32, i32, i32) {
    %c0_i32 = arith.constant 0 : i32
    %c0_i32_0 = arith.constant 0 : i32
    %c0_i32_1 = arith.constant 0 : i32
    %c0_i32_2 = arith.constant 0 : i32
    return %arg0, %c0_i32, %c0_i32_0, %c0_i32_1 : i32, i32, i32, i32
  }
}

</mosaic_0001>

<llo_original>
// kernel: tpu_custom_call.1
$region0: #{tpu_custom_call.1}
  #allocation0 [shape = 'u32[]', space=smem, size = 0x4, offset = 0x4, fixed_abs, tag = 'smem constant byte address 0x4 - core index']
  #allocation1 [shape = 'u32[144,128]{1,0:T(1,128)}', space=vmem, size = 0x12000, scoped, tag = 'internal scratch']
  %s0 = inlined_call_operand.hbm [shape: u8[2,3,16,16], index: 0, kind: input, shape index: {}, may-alias: {0,1}]
  %s1 = inlined_call_operand.hbm [shape: u8[2,3,16,16], index: 1, kind: output, shape index: {}, may-alias: {0,1}]
  %s2 = sld [smem:[#allocation0]]
  $region41: #{tpu_custom_call.1} parent=0
    _
  %s4 = ssub.s32 1, %s2
  %s5 = scalar_select 0, %s4, %s2
  $region1: #{tpu_custom_call.1} parent=0
    #allocation2 [shape = 'u8[12288]{0}', space=vmem, size = 0x3000, scoped, tag = 'input window, operand 0']
    #allocation3 [shape = 's32[2]{0}', space=sflag, size = 0x8, scoped, tag = 'scoped memory for tpu_custom_call.1']
    #allocation4 [shape = 's32[2]{0}', space=sflag, size = 0x8, scoped, tag = 'scoped memory for tpu_custom_call.1']
    #allocation5 [shape = 'u8[12288]{0}', space=vmem, size = 0x3000, scoped, tag = 'output window, operand 0']
    %6 = vsyncpa [#allocation3], 0
    %s7 = scalar_lea.sflag [#allocation3], 1
    %8 = vsyncpa %s7, 0
    %9 = vsyncpa [#allocation4], 0
    %s10 = scalar_lea.sflag [#allocation4], 1
    %11 = vsyncpa %s10, 0
    loop: start=0, step=1, limit=4
    $region2: #{tpu_custom_call.1} parent=1 // loop_pre_header
      _
    $region3: #{tpu_custom_call.1} parent=1 // loop_header
      %s13 = sphi 0, %s17
      %p14 = scmp.ge.s32.totalorder %s13, 4
      %s23 = sphi 0, %s25
      %s26 = sphi 0, %s23
      %s27 = sphi 0, %s26
      %s43 = sphi 0, %s27
      %s49 = sphi 0, %s51
      %s52 = sphi 0, %s49
      %s53 = sphi 0, %s52
      %s69 = sphi 0, %s53
    $region4: #{tpu_custom_call.1} parent=1 // loop_header_branch
      %16 = sbr.rel (%p14) target = $region8
    $region5: #{tpu_custom_call.1} parent=1 // loop_body
      %s18 = ssub.s32 %s13, 1
      %s19 = ssub.s32 %s13, 2
      %s20 = sadd.s32 %s13, 1
      %s21 = ssub.s32 %s13, %s20
      %p22 = scmp.eq.s32.totalorder %s21, 0
      %s24 = sadd.s32 %s23, 1
      %s25 = scalar_select %p22, %s23, %s24
      %p28 = pneg %p22
      %p29 = scmp.eq.s32.totalorder %s13, 1
      %p30 = por %p28, %p29
      %p31 = scmp.ne.s32.totalorder %s23, %s26
      %p32 = scmp.eq.s32.totalorder %s13, 0
      %p33 = por %p31, %p32
      %p34 = scmp.ne.s32.totalorder %s23, %s26
      %p35 = scmp.eq.s32.totalorder %s18, 1
      %p36 = por %p34, %p35
      %p37 = scmp.ne.s32.totalorder %s26, %s27
      %p38 = scmp.eq.s32.totalorder %s18, 0
      %p39 = por %p37, %p38
      %p40 = scmp.ne.s32.totalorder %s26, %s27
      %p41 = scmp.eq.s32.totalorder %s19, 1
      %p42 = por %p40, %p41
      %p44 = scmp.ne.s32.totalorder %s27, %s43
      %p45 = scmp.eq.s32.totalorder %s19, 0
      %p46 = por %p44, %p45
      %s47 = ssub.s32 %s13, %s20
      %p48 = scmp.eq.s32.totalorder %s47, 0
      %s50 = sadd.s32 %s49, 1
      %s51 = scalar_select %p48, %s49, %s50
      %p54 = pneg %p48
      %p55 = scmp.eq.s32.totalorder %s13, 1
      %p56 = por %p54, %p55
      %p57 = scmp.ne.s32.totalorder %s49, %s52
      %p58 = scmp.eq.s32.totalorder %s13, 0
      %p59 = por %p57, %p58
      %p60 = scmp.ne.s32.totalorder %s49, %s52
      %p61 = scmp.eq.s32.totalorder %s18, 1
      %p62 = por %p60, %p61
      %p63 = scmp.ne.s32.totalorder %s52, %s53
      %p64 = scmp.eq.s32.totalorder %s18, 0
      %p65 = por %p63, %p64
      %p66 = scmp.ne.s32.totalorder %s52, %s53
      %p67 = scmp.eq.s32.totalorder %s19, 1
      %p68 = por %p66, %p67
      %p70 = scmp.ne.s32.totalorder %s53, %s69
      %p71 = scmp.eq.s32.totalorder %s19, 0
      %p72 = por %p70, %p71
      %p73 = scmp.le.s32.totalorder 1, %s13
      %p74 = scmp.lt.s32.totalorder %s13, 3
      %p75 = pnand %p73, %p74
      %p76 = pneg %p75
      // Predicated region
      $region9: #{tpu_custom_call.1} parent=5 // pred_check
        _
      $region10: #{tpu_custom_call.1} parent=5 // pred_check_branch
        %78 = sbr.rel (%p75) target = $region12
      $region11: #{tpu_custom_call.1} parent=5 // pred_region
        %s79 = ssub.s32 %s13, 1
      $region12: #{tpu_custom_call.1} parent=5 // pred_fallthru
        _
      %p80 = scmp.lt.s32.totalorder %s13, 2
      // Predicated region
      $region13: #{tpu_custom_call.1} parent=5 // pred_check
        %p81 = pneg %p80
      $region14: #{tpu_custom_call.1} parent=5 // pred_check_branch
        %83 = sbr.rel (%p81) target = $region16
      $region15: #{tpu_custom_call.1} parent=5 // pred_region
        // Predicated region
        $region17: #{tpu_custom_call.1} parent=15 // pred_check
          %p84 = pneg %p33
        $region18: #{tpu_custom_call.1} parent=15 // pred_check_branch
          %86 = sbr.rel (%p84) target = $region20
        $region19: #{tpu_custom_call.1} parent=15 // pred_region
          %s87 = sand.u32 %s23, 1
          %s88 = scalar_lea.sflag [#allocation3], %s87
          %s89 = sand.u32 %s23, 1
          %s90 = smul.addr %s89, 12
          %s91 = scalar_lea.vmem [#allocation2], %s90
          %s93 = ssub.s32 192, 192
          %94 = vsyncadd %s88, %s93
          %s95 = smul.addr %s13, 6
          %s96 = smul.addr %s95, 32
          %s97 = scalar_lea.hbm %s0, %s96
          %s98 = sshll.u32 %s91, 4
          %s99 = int_to_ptr.vmem [resolvable:$true] %s98
          %104 = dma.hbm_to_vmem [thread:$0]  %s97, 192, %s99, %s88, 32, 32, 2
        $region20: #{tpu_custom_call.1} parent=15 // pred_fallthru
          _
      $region16: #{tpu_custom_call.1} parent=5 // pred_fallthru
        _
      %p105 = scmp.le.s32.totalorder 1, %s13
      %p106 = scmp.lt.s32.totalorder %s13, 3
      %p107 = pnand %p105, %p106
      %p108 = pneg %p107
      // Predicated region
      $region21: #{tpu_custom_call.1} parent=5 // pred_check
        _
      $region22: #{tpu_custom_call.1} parent=5 // pred_check_branch
        %110 = sbr.rel (%p107) target = $region24
      $region23: #{tpu_custom_call.1} parent=5 // pred_region
        %s111 = ssub.s32 %s13, 1
        %s112 = sand.u32 %s26, 1
        %s113 = scalar_lea.sflag [#allocation3], %s112
        %s114 = sand.u32 %s26, 1
        %s115 = smul.addr %s114, 12
        %s116 = scalar_lea.vmem [#allocation2], %s115
        // Predicated region
        $region25: #{tpu_custom_call.1} parent=23 // pred_check
          %p117 = pneg %p39
        $region26: #{tpu_custom_call.1} parent=23 // pred_check_branch
          %119 = sbr.rel (%p117) target = $region28
        $region27: #{tpu_custom_call.1} parent=23 // pred_region
          %120 = dma.done %s113, 192
        $region28: #{tpu_custom_call.1} parent=23 // pred_fallthru
          _
        %s121 = sand.u32 %s26, 1
        %s122 = scalar_lea.sflag [#allocation3], %s121
        %s123 = sand.u32 %s26, 1
        %s124 = smul.addr %s123, 12
        %s125 = scalar_lea.vmem [#allocation2], %s124
        %p126 = pneg %p39
        %p127 = pneg %p36
        %p128 = pneg %p65
        %p129 = pneg %p62
        %s130 = sand.u32 %s52, 1
        %s131 = scalar_lea.sflag [#allocation4], %s130
        %s132 = sand.u32 %s52, 1
        %s133 = smul.addr %s132, 12
        %s134 = scalar_lea.vmem [#allocation5], %s133
        %v135 = vld [vmem:[%s116] sm:$0x3]
        %v136 = vld [vmem:[%s116 + $0x2] sm:$0x3]
        %v137 = vld [vmem:[%s116 + $0x4] sm:$0x3]
        %v138 = vld [vmem:[%s116 + $0x6] sm:$0x3]
        %v139 = vld [vmem:[%s116 + $0x8] sm:$0x3]
        %v140 = vld [vmem:[%s116 + $0xa] sm:$0x3]
        %v141 = vunpack.c.0.s8 %v135
        %v142 = vunpack.c.0.s8 %v136
        %v143 = vunpack.c.0.s8 %v137
        %v144 = vunpack.c.0.s8 %v138
        %v145 = vunpack.c.0.s8 %v139
        %v146 = vunpack.c.0.s8 %v140
        %v147 = vand.u32 %v141, 255
        %v148 = vand.u32 %v142, 255
        %v149 = vand.u32 %v143, 255
        %v150 = vand.u32 %v144, 255
        %v151 = vand.u32 %v145, 255
        %v152 = vand.u32 %v146, 255
        %v153 = vmul.u32 %v147, 19595
        %v154 = vmul.u32 %v148, 19595
        %v155 = vmul.u32 %v149, 38470
        %v156 = vmul.u32 %v150, 38470
        %v157 = vadd.s32 %v153, %v155
        %v158 = vadd.s32 %v154, %v156
        %v159 = vmul.u32 %v151, 7471
        %v160 = vmul.u32 %v152, 7471
        %v161 = vadd.s32 %v157, %v159
        %v162 = vadd.s32 %v158, %v160
        %v163 = vadd.s32 %v161, 32768
        %v164 = vadd.s32 %v162, 32768
        %v165 = vshrl.u32 %v163, 16
        %v166 = vshrl.u32 %v164, 16
        %vm167 = vcmp.lt.s32.totalorder %v165, 50
        %vm168 = vcmp.lt.s32.totalorder %v166, 50
        %v169 = vsel %vm167, 1.0, 0.0
        %v170 = vsel %vm168, 1.0, 0.0
        %vm171 = vcmask 130048
        %v172 = vsel %vm171, %v169, -inf
        %173 = vmax.xlane.f32.xlu0 %v172
        %v174 = vpop.xlane.xlu0 %173
        %v175 = vsel %vm171, %v170, -inf
        %176 = vmax.xlane.f32.xlu0 %v175
        %v177 = vpop.xlane.xlu0 %176
        %vm178 = vcmp.gt.f32.partialorder %v174, 0.0
        %vm179 = vcmp.gt.f32.partialorder %v177, 0.0
        %v180 = vmax.f32 %v172, %v175
        %v181 = vrot.slane %v180, 4
        %v182 = vmax.f32 %v180, %v181
        %v183 = vrot.slane %v182, 2
        %v184 = vmax.f32 %v182, %v183
        %v185 = vrot.slane %v184, 1
        %v186 = vmax.f32 %v184, %v185
        %vm187 = vcmp.gt.f32.partialorder %v186, 0.0
        %v188 = vlaneseq
        %v189 = vshrl.u32 %v188, 7
        %v190 = vadd.s32 %v189, 8
        %v191 = vlaneseq
        %v192 = vand.u32 %v191, 127
        %v193 = vsel %vm178, %v189, 4294967295
        %v194 = vsel %vm179, %v190, 4294967295
        %vm195 = vcmp.gt.s32.totalorder %v193, %v194
        %v196 = vsel %vm195, %v193, %v194
        %v197 = vrot.slane %v196, 4
        %vm198 = vcmp.gt.s32.totalorder %v196, %v197
        %v199 = vsel %vm198, %v196, %v197
        %v200 = vrot.slane %v199, 2
        %vm201 = vcmp.gt.s32.totalorder %v199, %v200
        %v202 = vsel %vm201, %v199, %v200
        %v203 = vrot.slane %v202, 1
        %vm204 = vcmp.gt.s32.totalorder %v202, %v203
        %v205 = vsel %vm204, %v202, %v203
        %s206 = vtos %v205
        %v207 = vsel %vm187, %v192, 1073741824
        %v208 = vsel %vm171, %v207, 2147483647
        %v209 = vand.u32 %v208, 65535
        %v210 = vshra.s32 %v208, 16
        %v211 = vcvt.s32.f32 %v209
        %v212 = vcvt.s32.f32 %v210
        %213 = vmin.xlane.f32.xlu0 %v212
        %v214 = vpop.xlane.xlu0 %213
        %vm215 = vcmp.eq.f32.partialorder %v212, %v214
        %v216 = vsel %vm215, %v211, inf
        %217 = vmin.xlane.f32.xlu0 %v216
        %v218 = vpop.xlane.xlu0 %217
        %v219 = vcvt.f32.s32 %v218
        %v220 = vcvt.f32.s32 %v214
        %v221 = vshll.u32 %v220, 16
        %v222 = vadd.s32 %v221, %v219
        %s223 = vtos %v222
        %v224 = vsel %vm187, %v192, 4294967295
        %v225 = vsel %vm171, %v224, 2147483648
        %v226 = vand.u32 %v225, 65535
        %v227 = vshra.s32 %v225, 16
        %v228 = vcvt.s32.f32 %v226
        %v229 = vcvt.s32.f32 %v227
        %230 = vmax.xlane.f32.xlu0 %v229
        %v231 = vpop.xlane.xlu0 %230
        %vm232 = vcmp.eq.f32.partialorder %v229, %v231
        %v233 = vsel %vm232, %v228, -inf
        %234 = vmax.xlane.f32.xlu0 %v233
        %v235 = vpop.xlane.xlu0 %234
        %v236 = vcvt.f32.s32 %v235
        %v237 = vcvt.f32.s32 %v231
        %v238 = vshll.u32 %v237, 16
        %v239 = vadd.s32 %v238, %v236
        %s240 = vtos %v239
        %p241 = scmp.ge.s32.totalorder %s206, 0
        %v242 = vstv %s206
        %vm243 = vcmp.le.s32.totalorder %v189, %v242
        %vm244 = vcmp.le.s32.totalorder %v190, %v242
        %s245 = ssub.s32 %s206, 2
        %v246 = vstv %s245
        %vm247 = vcmp.ge.s32.totalorder %v189, %v246
        %vm248 = vcmp.ge.s32.totalorder %v190, %v246
        %vm249 = vmand %vm243, %vm247
        %vm250 = vmand %vm244, %vm248
        %v251 = vstv %s223
        %vm252 = vcmp.ge.s32.totalorder %v192, %v251
        %v253 = vstv %s240
        %vm254 = vcmp.lt.s32.totalorder %v192, %v253
        %vm255 = vmand %vm252, %vm254
        %v256 = vsel %vm249, 1, 0
        %v257 = vsel %vm250, 1, 0
        %vm258 = vcmp.eq.s32.totalorder %v256, 1
        %vm259 = vcmp.eq.s32.totalorder %v257, 1
        %v260 = vsel %vm255, 1, 0
        %vm261 = vcmp.eq.s32.totalorder %v260, 1
        %vm262 = vmand %vm258, %vm261
        %vm263 = vmand %vm259, %vm261
        %s264 = scalar_select %p241, 1, 0
        %v265 = vstv %s264
        %vm266 = vcmp.eq.s32.totalorder %v265, 1
        %vm267 = vmand %vm262, %vm266
        %vm268 = vmand %vm263, %vm266
        %v269 = vsel %vm267, 1, 0
        %v270 = vsel %vm268, 1, 0
        %vm271 = vcmp.eq.s32.totalorder %v269, 1
        %vm272 = vcmp.eq.s32.totalorder %v270, 1
        %v273 = vsel %vm271, 0, %v147
        %v274 = vsel %vm272, 0, %v148
        %v275 = vsel %vm271, 0, %v149
        %v276 = vsel %vm272, 0, %v150
        %v277 = vsel %vm271, 0, %v151
        %v278 = vsel %vm272, 0, %v152
        %v279 = vpack.c.b16 %v273, %v273
        %v280 = vpack.c.b8 %v279, %v279
        %v281 = vpack.c.b16 %v274, %v274
        %v282 = vpack.c.b8 %v281, %v281
        %v283 = vpack.c.b16 %v275, %v275
        %v284 = vpack.c.b8 %v283, %v283
        %v285 = vpack.c.b16 %v276, %v276
        %v286 = vpack.c.b8 %v285, %v285
        %v287 = vpack.c.b16 %v277, %v277
        %v288 = vpack.c.b8 %v287, %v287
        %v289 = vpack.c.b16 %v278, %v278
        %v290 = vpack.c.b8 %v289, %v289
        %vm291 = vcmask 123904
        %292 = vst.msk [vmem:[%s134] sm:$0x3] %vm291, %v280
        %293 = vst.msk [vmem:[%s134 + $0x2] sm:$0x3] %vm291, %v282
        %294 = vst.msk [vmem:[%s134 + $0x4] sm:$0x3] %vm291, %v284
        %295 = vst.msk [vmem:[%s134 + $0x6] sm:$0x3] %vm291, %v286
        %296 = vst.msk [vmem:[%s134 + $0x8] sm:$0x3] %vm291, %v288
        %297 = vst.msk [vmem:[%s134 + $0xa] sm:$0x3] %vm291, %v290
        %s298 = sand.u32 %s52, 1
        %s299 = scalar_lea.sflag [#allocation4], %s298
        %s300 = sand.u32 %s52, 1
        %s301 = smul.addr %s300, 12
        %s302 = scalar_lea.vmem [#allocation5], %s301
        // Predicated region
        $region29: #{tpu_custom_call.1} parent=23 // pred_check
          %p303 = pneg %p62
        $region30: #{tpu_custom_call.1} parent=23 // pred_check_branch
          %305 = sbr.rel (%p303) target = $region32
        $region31: #{tpu_custom_call.1} parent=23 // pred_region
          %s307 = ssub.s32 192, 192
          %308 = vsyncadd %s299, %s307
          %s309 = smul.addr %s18, 6
          %s310 = smul.addr %s309, 32
          %s311 = scalar_lea.hbm %s1, %s310
          %s312 = sshll.u32 %s302, 4
          %s313 = int_to_ptr.vmem [resolvable:$true] %s312
          %318 = dma.vmem_to_hbm [thread:$0]  %s313, 192, %s311, %s299, 32, 32, 2
        $region32: #{tpu_custom_call.1} parent=23 // pred_fallthru
          _
      $region24: #{tpu_custom_call.1} parent=5 // pred_fallthru
        _
      %p319 = scmp.le.s32.totalorder 2, %s13
      // Predicated region
      $region33: #{tpu_custom_call.1} parent=5 // pred_check
        %p320 = pneg %p319
      $region34: #{tpu_custom_call.1} parent=5 // pred_check_branch
        %322 = sbr.rel (%p320) target = $region36
      $region35: #{tpu_custom_call.1} parent=5 // pred_region
        %s323 = ssub.s32 %s13, 2
        // Predicated region
        $region37: #{tpu_custom_call.1} parent=35 // pred_check
          %p324 = pneg %p68
        $region38: #{tpu_custom_call.1} parent=35 // pred_check_branch
          %326 = sbr.rel (%p324) target = $region40
        $region39: #{tpu_custom_call.1} parent=35 // pred_region
          %s327 = sand.u32 %s53, 1
          %s328 = scalar_lea.sflag [#allocation4], %s327
          %s329 = sand.u32 %s53, 1
          %s330 = smul.addr %s329, 12
          %s331 = scalar_lea.vmem [#allocation5], %s330
          %332 = dma.done %s328, 192
        $region40: #{tpu_custom_call.1} parent=35 // pred_fallthru
          _
      $region36: #{tpu_custom_call.1} parent=5 // pred_fallthru
        _
    $region6: #{tpu_custom_call.1} parent=1 // loop_footer
      %s17 = sadd.s32 1, %s13
    $region7: #{tpu_custom_call.1} parent=1 // loop_footer_branch
      %12 = sbr.rel target = $region3
    $region8: #{tpu_custom_call.1} parent=1 // loop_exit
      _
    %333 = vsyncpa [#allocation3], 1
    %s334 = scalar_lea.sflag [#allocation3], 1
    %335 = vsyncpa %s334, 1
    %336 = vsyncpa [#allocation4], 1
    %s337 = scalar_lea.sflag [#allocation4], 1
    %338 = vsyncpa %s337, 1

</llo_original>
